<compile_context>
chip_gen: v7x
topology: tpu7x:2x2x1
jax: 0.10.0
libtpu: 0.0.40
codegen_flags: <defaults>
</compile_context>

<pallas_src>
import functools
import math

import jax
import jax.numpy as jnp
from jax.experimental import pallas as pl
from jax.experimental.pallas import tpu as pltpu

_H1 = 256      # fc1 width
_H2 = 128      # fc2 width
_SUBLANE = 8   # f32 sublane granularity


def _round_up(x: int, m: int) -> int:
    return (x + m - 1) // m * m


def _cdiv(a: int, b: int) -> int:
    return (a + b - 1) // b


@functools.lru_cache()
def _device_kind() -> str:
    try:
        return jax.devices()[0].device_kind.lower()
    except Exception:  # no device visible -> conservative defaults
        return ""


@functools.lru_cache()
def _num_tensorcores() -> int:
    # v7x has two TensorCores per chip; a ("parallel",) grid axis with >= 2 tiles
    # is sharded across them.  v5e / v6e have one TC per chip.
    k = _device_kind()
    return 2 if ("7x" in k or "v7" in k) else 1


@functools.lru_cache()
def _bf16_elementwise_ok() -> bool:
    # v5e and older have no bf16 VPU/EUP; keep bias-add / relu in f32 there.
    k = _device_kind()
    return not any(tag in k for tag in ("v2", "v3", "v4", "v5"))


def _actor_td3_kernel(bound_ref, x_ref, w1_ref, b1_ref, w2_ref, b2_ref,
                      w3_ref, b3_ref, out_ref):
    """One batch tile: out = tanh(relu(relu(x@W1+b1)@W2+b2)@W3+b3) * bound."""
    mm = w1_ref.dtype          # MXU operand dtype (bf16 or f32)
    ew = b1_ref.dtype          # elementwise dtype (bf16 on v6e/v7x, else f32)

    x = x_ref[...].astype(mm)

    # fc1 + relu
    h = jnp.dot(x, w1_ref[...], preferred_element_type=jnp.float32).astype(ew)
    h = jnp.maximum(h + b1_ref[...], 0.0).astype(mm)

    # fc2 + relu
    h = jnp.dot(h, w2_ref[...], preferred_element_type=jnp.float32).astype(ew)
    h = jnp.maximum(h + b2_ref[...], 0.0).astype(mm)

    # fc3 + tanh * action_bound (kept in f32; per-tile tanh count is tiny now)
    y = jnp.dot(h, w3_ref[...], preferred_element_type=jnp.float32)
    y = jnp.tanh(y + b3_ref[...]) * bound_ref[0, 0]

    out_ref[...] = y.astype(out_ref.dtype)


def _pick_batch_tile(B: int, block_b: int) -> int:
    """Batch-tile rows: big tiles amortize ~0.35us/grid-step; >=1 tile per TC."""
    n = _cdiv(B, block_b)
    # On multi-TensorCore chips ensure at least 2 tiles when the batch is big
    # enough to be worth splitting, so both cores get work.
    n = max(n, min(_num_tensorcores(), _cdiv(B, 256)))
    tb = _round_up(_cdiv(B, n), _SUBLANE)
    return min(tb, _round_up(B, _SUBLANE))


@functools.partial(jax.jit, static_argnames=("block_b", "use_bf16"))
def actor_td3_forward(state, w1, b1, w2, b2, w3, b3, action_bound, *,
                      block_b=2048, use_bf16=True):
    """Pallas forward pass of ActorTD3.

    state: (B, state_dim) f32
    w1: (state_dim, 256), b1: (1, 256)
    w2: (256, 128),       b2: (1, 128)
    w3: (128, action_dim),b3: (1, action_dim)
    action_bound: scalar
    returns (B, action_dim) f32

    use_bf16=True (default) runs the MXU with bf16 operands (weights *and*
    inter-layer activations) and f32 accumulation; use_bf16=False is exact f32.
    """
    B, state_dim = state.shape
    action_dim = w3.shape[1]

    mm_dtype = jnp.bfloat16 if use_bf16 else jnp.float32
    ew_dtype = jnp.bfloat16 if (use_bf16 and _bf16_elementwise_ok()) else jnp.float32

    # No-ops if the caller already stores weights/biases in these dtypes.
    w1c = w1.astype(mm_dtype)
    w2c = w2.astype(mm_dtype)
    w3c = w3.astype(mm_dtype)
    b1c = b1.astype(ew_dtype)
    b2c = b2.astype(ew_dtype)
    b3c = b3.astype(jnp.float32)
    bound = jnp.asarray(action_bound, jnp.float32).reshape(1, 1)

    tb = _pick_batch_tile(B, int(block_b))
    grid = (_cdiv(B, tb),)   # ragged last tile: rows independent, OOB writes dropped

    flops = 2 * B * (state_dim * _H1 + _H1 * _H2 + _H2 * action_dim)
    bytes_accessed = (
        B * state_dim * state.dtype.itemsize + B * action_dim * 4
        + sum(int(a.size) * a.dtype.itemsize for a in (w1c, w2c, w3c, b1c, b2c, b3c)))
    cost = pl.CostEstimate(flops=flops, transcendentals=B * action_dim,
                           bytes_accessed=bytes_accessed)

    return pl.pallas_call(
        _actor_td3_kernel,
        out_shape=jax.ShapeDtypeStruct((B, action_dim), jnp.float32),
        grid=grid,
        in_specs=[
            # action_bound scalar lives in SMEM (no recompile when it changes).
            pl.BlockSpec(memory_space=pltpu.MemorySpace.SMEM),
            # state streamed in batch tiles (full rows: last dim == array dim).
            pl.BlockSpec((tb, state_dim), lambda i: (i, 0)),
            # weights/biases: constant block index -> DMA'd once, VMEM-resident.
            pl.BlockSpec(w1c.shape, lambda i: (0, 0)),
            pl.BlockSpec(b1c.shape, lambda i: (0, 0)),
            pl.BlockSpec(w2c.shape, lambda i: (0, 0)),
            pl.BlockSpec(b2c.shape, lambda i: (0, 0)),
            pl.BlockSpec(w3c.shape, lambda i: (0, 0)),
            pl.BlockSpec(b3c.shape, lambda i: (0, 0)),
        ],
        # Narrow (tb, action_dim) output: ~action_dim*4 B/row of writeback instead
        # of a 512 B/row zero-padded slab, and no wrapper-side slice afterwards.
        out_specs=pl.BlockSpec((tb, action_dim), lambda i: (i, 0)),
        compiler_params=pltpu.CompilerParams(
            dimension_semantics=("parallel",),       # batch tiles are independent
            vmem_limit_bytes=48 * 1024 * 1024),
        cost_estimate=cost,
    )(bound, state, w1c, b1c, w2c, b2c, w3c, b3c)


def init_actor_td3_params(key, state_dim, action_dim):
    """PyTorch nn.Linear default init (uniform +/- 1/sqrt(fan_in)); (in, out) layout."""
    ks = jax.random.split(key, 6)

    def linear(kw, kb, fan_in, fan_out):
        bnd = 1.0 / math.sqrt(fan_in)
        w = jax.random.uniform(kw, (fan_in, fan_out), jnp.float32, -bnd, bnd)
        b = jax.random.uniform(kb, (1, fan_out), jnp.float32, -bnd, bnd)
        return w, b

    w1, b1 = linear(ks[0], ks[1], state_dim, _H1)
    w2, b2 = linear(ks[2], ks[3], _H1, _H2)
    w3, b3 = linear(ks[4], ks[5], _H2, action_dim)
    return w1, b1, w2, b2, w3, b3


def _reference(state, w1, b1, w2, b2, w3, b3, action_bound):
    h = jnp.maximum(state @ w1 + b1, 0.0)
    h = jnp.maximum(h @ w2 + b2, 0.0)
    return jnp.tanh(h @ w3 + b3) * action_bound


if __name__ == "__main__":
    state_dim, action_dim, action_bound = 24, 6, 2.0

    key = jax.random.PRNGKey(0)
    pkey, k1, k2, k3 = jax.random.split(key, 4)
    params = init_actor_td3_params(pkey, state_dim, action_dim)

    # Exact f32 path, aligned small batch (B = 8).
    s8 = jax.random.normal(k1, (8, state_dim), jnp.float32)
    out8 = jax.block_until_ready(
        actor_td3_forward(s8, *params, action_bound, use_bf16=False))
    ref8 = _reference(s8, *params, action_bound)
    assert out8.shape == (8, action_dim)
    assert jnp.allclose(out8, ref8, atol=1e-4, rtol=1e-4)

    # Unaligned batch (B = 5) exercises the ragged (OOB-masked) tile.
    s5 = jax.random.normal(k2, (5, state_dim), jnp.float32)
    out5 = jax.block_until_ready(
        actor_td3_forward(s5, *params, action_bound, use_bf16=False))
    ref5 = _reference(s5, *params, action_bound)
    assert out5.shape == (5, action_dim)
    assert jnp.allclose(out5, ref5, atol=1e-4, rtol=1e-4)

    # Multi-tile grid with a ragged last tile (B = 37, tiny forced tile size).
    s37 = jax.random.normal(k3, (37, state_dim), jnp.float32)
    out37 = jax.block_until_ready(
        actor_td3_forward(s37, *params, action_bound, block_b=16, use_bf16=False))
    ref37 = _reference(s37, *params, action_bound)
    assert out37.shape == (37, action_dim)
    assert jnp.allclose(out37, ref37, atol=1e-4, rtol=1e-4)

    # Default bf16-MXU path (f32 accumulation): loose tolerance.
    out_bf16 = jax.block_until_ready(actor_td3_forward(s8, *params, action_bound))
    assert out_bf16.shape == (8, action_dim)
    assert jnp.allclose(out_bf16, ref8, atol=1e-1, rtol=1e-1)

    print("KERNEL_OK")
</pallas_src>

<mosaic_0001>
module attributes {stable_mosaic.version = 11 : i64} {
  func.func @_actor_td3_kernel(%arg0: i32, %arg1: memref<1x1xf32, #tpu.memory_space<smem>>, %arg2: memref<8x24xf32, #tpu.memory_space<vmem>>, %arg3: memref<24x256xf32, #tpu.memory_space<vmem>>, %arg4: memref<1x256xf32, #tpu.memory_space<vmem>>, %arg5: memref<256x128xf32, #tpu.memory_space<vmem>>, %arg6: memref<1x128xf32, #tpu.memory_space<vmem>>, %arg7: memref<128x6xf32, #tpu.memory_space<vmem>>, %arg8: memref<1x6xf32, #tpu.memory_space<vmem>>, %arg9: memref<8x6xf32, #tpu.memory_space<vmem>>) attributes {dimension_semantics = [#tpu.dimension_semantics<parallel>], iteration_bounds = array<i64: 1>, scalar_prefetch = 0 : i64, scratch_operands = 0 : i64, tpu.core_type = #tpu.core_type<tc>, window_params = [{transform_indices = @transform_0, window_bounds = array<i64: 1, 1>}, {transform_indices = @transform_1, window_bounds = array<i64: 8, 24>}, {pipeline_mode = #tpu.pipeline_mode<synchronous>, transform_indices = @transform_2, window_bounds = array<i64: 24, 256>}, {pipeline_mode = #tpu.pipeline_mode<synchronous>, transform_indices = @transform_3, window_bounds = array<i64: 1, 256>}, {pipeline_mode = #tpu.pipeline_mode<synchronous>, transform_indices = @transform_4, window_bounds = array<i64: 256, 128>}, {pipeline_mode = #tpu.pipeline_mode<synchronous>, transform_indices = @transform_5, window_bounds = array<i64: 1, 128>}, {pipeline_mode = #tpu.pipeline_mode<synchronous>, transform_indices = @transform_6, window_bounds = array<i64: 128, 6>}, {pipeline_mode = #tpu.pipeline_mode<synchronous>, transform_indices = @transform_7, window_bounds = array<i64: 1, 6>}, {transform_indices = @transform_8, window_bounds = array<i64: 8, 6>}]} {
    %c0 = arith.constant 0 : index
    %c0_0 = arith.constant 0 : index
    %0 = vector.load %arg2[%c0, %c0_0] : memref<8x24xf32, #tpu.memory_space<vmem>>, vector<8x24xf32>
    %c0_1 = arith.constant 0 : index
    %c0_2 = arith.constant 0 : index
    %1 = vector.load %arg3[%c0_1, %c0_2] : memref<24x256xf32, #tpu.memory_space<vmem>>, vector<24x256xf32>
    %cst = arith.constant dense<0.000000e+00> : vector<8x256xf32>
    %2 = tpu.matmul %0, %1, %cst {dimension_numbers = #tpu.dot_dimension_numbers<[1], [0], [0], [1], [0, 0, 1, 1], [], []>} : vector<8x24xf32>, vector<24x256xf32>, vector<8x256xf32> -> vector<8x256xf32>
    %c0_3 = arith.constant 0 : index
    %c0_4 = arith.constant 0 : index
    %3 = vector.load %arg4[%c0_3, %c0_4] : memref<1x256xf32, #tpu.memory_space<vmem>>, vector<1x256xf32>
    %4 = vector.broadcast %3 : vector<1x256xf32> to vector<8x256xf32>
    %5 = arith.addf %2, %4 : vector<8x256xf32>
    %cst_5 = arith.constant 0.000000e+00 : f32
    %6 = vector.broadcast %cst_5 : f32 to vector<8x256xf32>
    %7 = arith.maximumf %5, %6 : vector<8x256xf32>
    %c0_6 = arith.constant 0 : index
    %c0_7 = arith.constant 0 : index
    %8 = vector.load %arg5[%c0_6, %c0_7] : memref<256x128xf32, #tpu.memory_space<vmem>>, vector<256x128xf32>
    %cst_8 = arith.constant dense<0.000000e+00> : vector<8x128xf32>
    %9 = tpu.matmul %7, %8, %cst_8 {dimension_numbers = #tpu.dot_dimension_numbers<[1], [0], [0], [1], [0, 0, 1, 1], [], []>} : vector<8x256xf32>, vector<256x128xf32>, vector<8x128xf32> -> vector<8x128xf32>
    %c0_9 = arith.constant 0 : index
    %c0_10 = arith.constant 0 : index
    %10 = vector.load %arg6[%c0_9, %c0_10] : memref<1x128xf32, #tpu.memory_space<vmem>>, vector<1x128xf32>
    %11 = vector.broadcast %10 : vector<1x128xf32> to vector<8x128xf32>
    %12 = arith.addf %9, %11 : vector<8x128xf32>
    %cst_11 = arith.constant 0.000000e+00 : f32
    %13 = vector.broadcast %cst_11 : f32 to vector<8x128xf32>
    %14 = arith.maximumf %12, %13 : vector<8x128xf32>
    %c0_12 = arith.constant 0 : index
    %c0_13 = arith.constant 0 : index
    %15 = vector.load %arg7[%c0_12, %c0_13] : memref<128x6xf32, #tpu.memory_space<vmem>>, vector<128x6xf32>
    %cst_14 = arith.constant dense<0.000000e+00> : vector<8x6xf32>
    %16 = tpu.matmul %14, %15, %cst_14 {dimension_numbers = #tpu.dot_dimension_numbers<[1], [0], [0], [1], [0, 0, 1, 1], [], []>} : vector<8x128xf32>, vector<128x6xf32>, vector<8x6xf32> -> vector<8x6xf32>
    %c0_15 = arith.constant 0 : index
    %c0_16 = arith.constant 0 : index
    %17 = vector.load %arg8[%c0_15, %c0_16] : memref<1x6xf32, #tpu.memory_space<vmem>>, vector<1x6xf32>
    %18 = vector.broadcast %17 : vector<1x6xf32> to vector<8x6xf32>
    %19 = arith.addf %16, %18 : vector<8x6xf32>
    %20 = math.tanh %19 : vector<8x6xf32>
    %c0_17 = arith.constant 0 : index
    %c0_18 = arith.constant 0 : index
    %21 = memref.load %arg1[%c0_17, %c0_18] : memref<1x1xf32, #tpu.memory_space<smem>>
    %22 = vector.broadcast %21 : f32 to vector<8x6xf32>
    %23 = arith.mulf %20, %22 : vector<8x6xf32>
    %c0_19 = arith.constant 0 : index
    %c0_20 = arith.constant 0 : index
    %24 = vector.load %arg9[%c0_19, %c0_20] : memref<8x6xf32, #tpu.memory_space<vmem>>, vector<8x6xf32>
    tpu.vector_store %arg9[%c0_19, %c0_20], %23 {strides = array<i32>} : memref<8x6xf32, #tpu.memory_space<vmem>>, vector<8x6xf32>,
    return
  }
  func.func @transform_0(%arg0: i32) -> (i32, i32) {
    %c0_i32 = arith.constant 0 : i32
    %c0_i32_0 = arith.constant 0 : i32
    %c0_i32_1 = arith.constant 0 : i32
    return %c0_i32, %c0_i32_0 : i32, i32
  }
  func.func @transform_1(%arg0: i32) -> (i32, i32) {
    %c0_i32 = arith.constant 0 : i32
    %c0_i32_0 = arith.constant 0 : i32
    return %arg0, %c0_i32 : i32, i32
  }
  func.func @transform_2(%arg0: i32) -> (i32, i32) {
    %c0_i32 = arith.constant 0 : i32
    %c0_i32_0 = arith.constant 0 : i32
    %c0_i32_1 = arith.constant 0 : i32
    return %c0_i32, %c0_i32_0 : i32, i32
  }
  func.func @transform_3(%arg0: i32) -> (i32, i32) {
    %c0_i32 = arith.constant 0 : i32
    %c0_i32_0 = arith.constant 0 : i32
    %c0_i32_1 = arith.constant 0 : i32
    return %c0_i32, %c0_i32_0 : i32, i32
  }
  func.func @transform_4(%arg0: i32) -> (i32, i32) {
    %c0_i32 = arith.constant 0 : i32
    %c0_i32_0 = arith.constant 0 : i32
    %c0_i32_1 = arith.constant 0 : i32
    return %c0_i32, %c0_i32_0 : i32, i32
  }
  func.func @transform_5(%arg0: i32) -> (i32, i32) {
    %c0_i32 = arith.constant 0 : i32
    %c0_i32_0 = arith.constant 0 : i32
    %c0_i32_1 = arith.constant 0 : i32
    return %c0_i32, %c0_i32_0 : i32, i32
  }
  func.func @transform_6(%arg0: i32) -> (i32, i32) {
    %c0_i32 = arith.constant 0 : i32
    %c0_i32_0 = arith.constant 0 : i32
    %c0_i32_1 = arith.constant 0 : i32
    return %c0_i32, %c0_i32_0 : i32, i32
  }
  func.func @transform_7(%arg0: i32) -> (i32, i32) {
    %c0_i32 = arith.constant 0 : i32
    %c0_i32_0 = arith.constant 0 : i32
    %c0_i32_1 = arith.constant 0 : i32
    return %c0_i32, %c0_i32_0 : i32, i32
  }
  func.func @transform_8(%arg0: i32) -> (i32, i32) {
    %c0_i32 = arith.constant 0 : i32
    %c0_i32_0 = arith.constant 0 : i32
    return %arg0, %c0_i32 : i32, i32
  }
}

</mosaic_0001>

<llo_original>
// kernel: actor_td3_forward.1
$region0: #{actor_td3_forward.1}
  #allocation0 [shape = 'u32[]', space=smem, size = 0x4, offset = 0x4, fixed_abs, tag = 'smem constant byte address 0x4 - core index']
  #allocation1 [shape = 'u32[144,128]{1,0:T(1,128)}', space=vmem, size = 0x12000, scoped, tag = 'internal scratch']
  #allocation2 [shape = 'f32[1,1]{1,0:T(1,128)S(6)}', space=smem, size = 0x200, scoped, tag = 'scoped memory for actor_td3_forward.1']
  %s0 = inlined_call_operand.<no memory space> [shape: f32[1,1], index: 0, kind: input, shape index: {}]
  %s1 = inlined_call_operand.vmem [shape: f32[8,24], index: 1, kind: input, shape index: {}]
  %s2 = inlined_call_operand.vmem [shape: f32[24,256], index: 2, kind: input, shape index: {}]
  %s3 = inlined_call_operand.vmem [shape: f32[1,256], index: 3, kind: input, shape index: {}]
  %s4 = inlined_call_operand.hbm [shape: f32[256,128], index: 4, kind: input, shape index: {}]
  %s5 = inlined_call_operand.vmem [shape: f32[1,128], index: 5, kind: input, shape index: {}]
  %s6 = inlined_call_operand.vmem [shape: f32[128,6], index: 6, kind: input, shape index: {}]
  %s7 = inlined_call_operand.vmem [shape: f32[1,6], index: 7, kind: input, shape index: {}]
  %s8 = inlined_call_operand.hbm [shape: f32[8,6], index: 8, kind: output, shape index: {}]
  %s9 = sld [smem:[#allocation0]]
  $region46: #{actor_td3_forward.1} parent=0
    _
  %s11 = ssub.s32 1, %s9
  %s12 = scalar_select 0, %s11, %s9
  %13 = sst [smem:[#allocation2]] %s0
  $region1: #{actor_td3_forward.1} parent=0
    #allocation3 [shape = 'u8[131072]{0}', space=vmem, size = 0x20000, scoped, tag = 'input window, operand 4, single buffered']
    #allocation4 [shape = 's32[1]{0}', space=sflag, size = 0x4, scoped, tag = 'scoped memory for actor_td3_forward.1']
    #allocation5 [shape = 's32[1]{0}', space=sflag, size = 0x4, scoped, tag = 'scoped memory for actor_td3_forward.1']
    #allocation6 [shape = 'u8[4096]{0}', space=vmem, size = 0x1000, scoped, tag = 'output window, operand 0, single buffered']
    %14 = vsyncpa [#allocation4], 0
    %15 = vsyncpa [#allocation5], 0
    // Predicated region
    $region2: #{actor_td3_forward.1} parent=1 // pred_check
      _
    $region3: #{actor_td3_forward.1} parent=1 // pred_check_branch
      %17 = sbr.rel (0) target = $region5
    $region4: #{actor_td3_forward.1} parent=1 // pred_region
      _
    $region5: #{actor_td3_forward.1} parent=1 // pred_fallthru
      _
    // Predicated region
    $region6: #{actor_td3_forward.1} parent=1 // pred_check
      _
    $region7: #{actor_td3_forward.1} parent=1 // pred_check_branch
      %19 = sbr.rel (0) target = $region9
    $region8: #{actor_td3_forward.1} parent=1 // pred_region
      _
    $region9: #{actor_td3_forward.1} parent=1 // pred_fallthru
      _
    // Predicated region
    $region10: #{actor_td3_forward.1} parent=1 // pred_check
      _
    $region11: #{actor_td3_forward.1} parent=1 // pred_check_branch
      %21 = sbr.rel (0) target = $region13
    $region12: #{actor_td3_forward.1} parent=1 // pred_region
      _
    $region13: #{actor_td3_forward.1} parent=1 // pred_fallthru
      _
    // Predicated region
    $region14: #{actor_td3_forward.1} parent=1 // pred_check
      _
    $region15: #{actor_td3_forward.1} parent=1 // pred_check_branch
      %23 = sbr.rel (0) target = $region17
    $region16: #{actor_td3_forward.1} parent=1 // pred_region
      _
    $region17: #{actor_td3_forward.1} parent=1 // pred_fallthru
      _
    // Predicated region
    $region18: #{actor_td3_forward.1} parent=1 // pred_check
      _
    $region19: #{actor_td3_forward.1} parent=1 // pred_check_branch
      %25 = sbr.rel (0) target = $region21
    $region20: #{actor_td3_forward.1} parent=1 // pred_region
      %s27 = ssub.s32 4096, 4096
      %28 = vsyncadd [#allocation4], %s27
      %s29 = sshll.u32 [#allocation3], 4
      %s30 = int_to_ptr.vmem [resolvable:$true] %s29
      %35 = dma.hbm_to_vmem [thread:$0]  %s4, 4096, %s30, [#allocation4], 128, 128, 8
    $region21: #{actor_td3_forward.1} parent=1 // pred_fallthru
      _
    // Predicated region
    $region22: #{actor_td3_forward.1} parent=1 // pred_check
      _
    $region23: #{actor_td3_forward.1} parent=1 // pred_check_branch
      %37 = sbr.rel (0) target = $region25
    $region24: #{actor_td3_forward.1} parent=1 // pred_region
      _
    $region25: #{actor_td3_forward.1} parent=1 // pred_fallthru
      _
    // Predicated region
    $region26: #{actor_td3_forward.1} parent=1 // pred_check
      _
    $region27: #{actor_td3_forward.1} parent=1 // pred_check_branch
      %39 = sbr.rel (0) target = $region29
    $region28: #{actor_td3_forward.1} parent=1 // pred_region
      _
    $region29: #{actor_td3_forward.1} parent=1 // pred_fallthru
      _
    // Predicated region
    $region30: #{actor_td3_forward.1} parent=1 // pred_check
      _
    $region31: #{actor_td3_forward.1} parent=1 // pred_check_branch
      %41 = sbr.rel (0) target = $region33
    $region32: #{actor_td3_forward.1} parent=1 // pred_region
      _
    $region33: #{actor_td3_forward.1} parent=1 // pred_fallthru
      _
    // Predicated region
    $region34: #{actor_td3_forward.1} parent=1 // pred_check
      _
    $region35: #{actor_td3_forward.1} parent=1 // pred_check_branch
      %43 = sbr.rel (0) target = $region37
    $region36: #{actor_td3_forward.1} parent=1 // pred_region
      %44 = dma.done [#allocation4], 4096
    $region37: #{actor_td3_forward.1} parent=1 // pred_fallthru
      _
    %v45 = vld [vmem:[%s1] sm:$0xff]
    %v46 = vld [vmem:[%s2] sm:$0xff]
    %v47 = vld [vmem:[%s2 + $0x8] sm:$0xff]
    %v48 = vld [vmem:[%s2 + $0x10] sm:$0xff]
    %v49 = vld [vmem:[%s2 + $0x18] sm:$0xff]
    %v50 = vld [vmem:[%s2 + $0x20] sm:$0xff]
    %v51 = vld [vmem:[%s2 + $0x28] sm:$0xff]
    %v52 = vld [vmem:[%s3] sm:$0x3]
    %v54 = vlaneseq
    %v55 = vshrl.u32 %v54, 7
    %v56 = vsub.s32 0, %v55
    %v57 = vrot.slane %v52, %v56
    %v58 = vlaneseq
    %v59 = vshrl.u32 %v58, 7
    %v60 = vsub.s32 1, %v59
    %v61 = vrot.slane %v52, %v60
    %vm64 = vcmask 195584
    %v66 = vsel %vm64, %v45, 0
    %68 = vmatprep.subr.mxu0 %v47
    %69 = vmatpush1.msra.mxu0 %v46
    %70 = vmatprep.subr.mxu0 %v49
    %71 = vmatpush1.msra.mxu0 %v48
    %72 = vmatprep.subr.mxu0 %v51
    %73 = vmatpush1.msra.mxu0 %v50
    %74 = vmatprep.subr.mxu0 0.0
    %75 = vmatpush1.msra.mxu0 0.0
    %76 = vmatprep.subr.mxu0 0.0
    %77 = vmatpush1.msra.mxu0 0.0
    %78 = vmatprep.subr.mxu0 0.0
    %79 = vmatpush1.msra.mxu0 0.0
    %80 = vmatprep.subr.mxu0 0.0
    %81 = vmatpush1.msra.mxu0 0.0
    %82 = vmatprep.subr.mxu0 0.0
    %83 = vmatpush1.msra.mxu0 0.0
    %84 = vmatprep.subr.mxu0 0.0
    %85 = vmatpush1.msra.mxu0 0.0
    %86 = vmatprep.subr.mxu0 0.0
    %87 = vmatpush1.msra.mxu0 0.0
    %88 = vmatprep.subr.mxu0 0.0
    %89 = vmatpush1.msra.mxu0 0.0
    %90 = vmatprep.subr.mxu0 0.0
    %91 = vmatpush1.msra.mxu0 0.0
    %92 = vmatprep.subr.mxu0 0.0
    %93 = vmatpush1.msra.mxu0 0.0
    %94 = vmatprep.subr.mxu0 0.0
    %95 = vmatpush1.msra.mxu0 0.0
    %96 = vmatprep.subr.mxu0 0.0
    %97 = vmatpush1.msra.mxu0 0.0
    %98 = vmatprep.subr.mxu0 0.0
    %99 = vmatpush1.msra.mxu0 0.0
    %100 = vmatprep.subr.mxu0 0.0
    %101 = vmatpush1.msra.mxu0 0.0
    %102 = vmatprep.subr.mxu0 0.0
    %103 = vmatpush1.msra.mxu0 0.0
    %104 = vmatprep.subr.mxu0 0.0
    %105 = vmatpush1.msra.mxu0 0.0
    %106 = vmatprep.subr.mxu0 0.0
    %107 = vmatpush1.msra.mxu0 0.0
    %108 = vmatprep.subr.mxu0 0.0
    %109 = vmatpush1.msra.mxu0 0.0
    %110 = vmatprep.subr.mxu0 0.0
    %111 = vmatpush1.msra.mxu0 0.0
    %112 = vmatprep.subr.mxu0 0.0
    %113 = vmatpush1.msra.mxu0 0.0
    %114 = vmatprep.subr.mxu0 0.0
    %115 = vmatpush1.msra.mxu0 0.0
    %116 = vmatprep.subr.mxu0 0.0
    %117 = vmatpush1.msra.mxu0 0.0
    %118 = vmatprep.subr.mxu0 0.0
    %119 = vmatpush1.msra.mxu0 0.0
    %120 = vmatprep.subr.mxu0 0.0
    %121 = vmatpush1.msra.mxu0 0.0
    %122 = vmatprep.subr.mxu0 0.0
    %123 = vmatpush1.msra.mxu0 0.0
    %124 = vmatprep.subr.mxu0 0.0
    %125 = vmatpush1.msra.mxu0 0.0
    %126 = vmatprep.subr.mxu0 0.0
    %127 = vmatpush1.msra.mxu0 0.0
    %128 = vmatprep.subr.mxu0 0.0
    %129 = vmatpush1.msra.mxu0 0.0
    %130 = vmatprep.subr.mxu0 0.0
    %131 = vmatpush1.msra.mxu0 0.0
    %132 = vmatprep.mubr.f32.mxu0 0.0
    %133 = vmatmul.mubr.f32.gmra.mrb[0].mxu0 %v66
    %v134 = vpop.f32.mrb[0].mxu0
    %v135 = vadd.f32 %v57, %v134
    %v136 = vpop.f32.mrb[0].mxu0
    %v137 = vadd.f32 %v61, %v136
    %138 = vdwg.mxu0
    %v139 = vmax.f32 %v135, 0.0
    %v140 = vmax.f32 %v137, 0.0
    %v141 = vld [vmem:[#allocation3] sm:$0xff]
    %v142 = vld [vmem:[#allocation3 + $0x8] sm:$0xff]
    %v143 = vld [vmem:[#allocation3 + $0x10] sm:$0xff]
    %v144 = vld [vmem:[#allocation3 + $0x18] sm:$0xff]
    %v145 = vld [vmem:[#allocation3 + $0x20] sm:$0xff]
    %v146 = vld [vmem:[#allocation3 + $0x28] sm:$0xff]
    %v147 = vld [vmem:[#allocation3 + $0x30] sm:$0xff]
    %v148 = vld [vmem:[#allocation3 + $0x38] sm:$0xff]
    %v149 = vld [vmem:[#allocation3 + $0x40] sm:$0xff]
    %v150 = vld [vmem:[#allocation3 + $0x48] sm:$0xff]
    %v151 = vld [vmem:[#allocation3 + $0x50] sm:$0xff]
    %v152 = vld [vmem:[#allocation3 + $0x58] sm:$0xff]
    %v153 = vld [vmem:[#allocation3 + $0x60] sm:$0xff]
    %v154 = vld [vmem:[#allocation3 + $0x68] sm:$0xff]
    %v155 = vld [vmem:[#allocation3 + $0x70] sm:$0xff]
    %v156 = vld [vmem:[#allocation3 + $0x78] sm:$0xff]
    %v157 = vld [vmem:[#allocation3 + $0x80] sm:$0xff]
    %v158 = vld [vmem:[#allocation3 + $0x88] sm:$0xff]
    %v159 = vld [vmem:[#allocation3 + $0x90] sm:$0xff]
    %v160 = vld [vmem:[#allocation3 + $0x98] sm:$0xff]
    %v161 = vld [vmem:[#allocation3 + $0xa0] sm:$0xff]
    %v162 = vld [vmem:[#allocation3 + $0xa8] sm:$0xff]
    %v163 = vld [vmem:[#allocation3 + $0xb0] sm:$0xff]
    %v164 = vld [vmem:[#allocation3 + $0xb8] sm:$0xff]
    %v165 = vld [vmem:[#allocation3 + $0xc0] sm:$0xff]
    %v166 = vld [vmem:[#allocation3 + $0xc8] sm:$0xff]
    %v167 = vld [vmem:[#allocation3 + $0xd0] sm:$0xff]
    %v168 = vld [vmem:[#allocation3 + $0xd8] sm:$0xff]
    %v169 = vld [vmem:[#allocation3 + $0xe0] sm:$0xff]
    %v170 = vld [vmem:[#allocation3 + $0xe8] sm:$0xff]
    %v171 = vld [vmem:[#allocation3 + $0xf0] sm:$0xff]
    %v172 = vld [vmem:[#allocation3 + $0xf8] sm:$0xff]
    %v173 = vld [vmem:[%s5] sm:$0x1]
    %v175 = vlaneseq
    %v176 = vshrl.u32 %v175, 7
    %v177 = vsub.s32 0, %v176
    %v178 = vrot.slane %v173, %v177
    %180 = vmatprep.subr.mxu0 0.0
    %181 = vmatpush1.msra.mxu0 %v141
    %182 = vmatprep.subr.mxu0 0.0
    %183 = vmatpush1.msra.mxu0 %v142
    %184 = vmatprep.subr.mxu0 0.0
    %185 = vmatpush1.msra.mxu0 %v143
    %186 = vmatprep.subr.mxu0 0.0
    %187 = vmatpush1.msra.mxu0 %v144
    %188 = vmatprep.subr.mxu0 0.0
    %189 = vmatpush1.msra.mxu0 %v145
    %190 = vmatprep.subr.mxu0 0.0
    %191 = vmatpush1.msra.mxu0 %v146
    %192 = vmatprep.subr.mxu0 0.0
    %193 = vmatpush1.msra.mxu0 %v147
    %194 = vmatprep.subr.mxu0 0.0
    %195 = vmatpush1.msra.mxu0 %v148
    %196 = vmatprep.subr.mxu0 0.0
    %197 = vmatpush1.msra.mxu0 %v149
    %198 = vmatprep.subr.mxu0 0.0
    %199 = vmatpush1.msra.mxu0 %v150
    %200 = vmatprep.subr.mxu0 0.0
    %201 = vmatpush1.msra.mxu0 %v151
    %202 = vmatprep.subr.mxu0 0.0
    %203 = vmatpush1.msra.mxu0 %v152
    %204 = vmatprep.subr.mxu0 0.0
    %205 = vmatpush1.msra.mxu0 %v153
    %206 = vmatprep.subr.mxu0 0.0
    %207 = vmatpush1.msra.mxu0 %v154
    %208 = vmatprep.subr.mxu0 0.0
    %209 = vmatpush1.msra.mxu0 %v155
    %210 = vmatprep.subr.mxu0 0.0
    %211 = vmatpush1.msra.mxu0 %v156
    %212 = vmatprep.subr.mxu0 0.0
    %213 = vmatpush1.msra.mxu0 %v157
    %214 = vmatprep.subr.mxu0 0.0
    %215 = vmatpush1.msra.mxu0 %v158
    %216 = vmatprep.subr.mxu0 0.0
    %217 = vmatpush1.msra.mxu0 %v159
    %218 = vmatprep.subr.mxu0 0.0
    %219 = vmatpush1.msra.mxu0 %v160
    %220 = vmatprep.subr.mxu0 0.0
    %221 = vmatpush1.msra.mxu0 %v161
    %222 = vmatprep.subr.mxu0 0.0
    %223 = vmatpush1.msra.mxu0 %v162
    %224 = vmatprep.subr.mxu0 0.0
    %225 = vmatpush1.msra.mxu0 %v163
    %226 = vmatprep.subr.mxu0 0.0
    %227 = vmatpush1.msra.mxu0 %v164
    %228 = vmatprep.subr.mxu0 0.0
    %229 = vmatpush1.msra.mxu0 %v165
    %230 = vmatprep.subr.mxu0 0.0
    %231 = vmatpush1.msra.mxu0 %v166
    %232 = vmatprep.subr.mxu0 0.0
    %233 = vmatpush1.msra.mxu0 %v167
    %234 = vmatprep.subr.mxu0 0.0
    %235 = vmatpush1.msra.mxu0 %v168
    %236 = vmatprep.subr.mxu0 0.0
    %237 = vmatpush1.msra.mxu0 %v169
    %238 = vmatprep.subr.mxu0 0.0
    %239 = vmatpush1.msra.mxu0 %v170
    %240 = vmatprep.subr.mxu0 0.0
    %241 = vmatpush1.msra.mxu0 %v171
    %242 = vmatprep.subr.mxu0 0.0
    %243 = vmatpush1.msra.mxu0 %v172
    %244 = vmatprep.mubr.f32.mxu0 %v140
    %245 = vmatmul.mubr.f32.gmra.mrb[0].mxu0 %v139
    %v246 = vpop.f32.mrb[0].mxu0
    %v247 = vadd.f32 %v178, %v246
    %v248 = vpop.f32.mrb[0].mxu0
    %249 = vdwg.mxu0
    %v250 = vmax.f32 %v247, 0.0
    %v251 = vld [vmem:[%s6] sm:$0xff]
    %v252 = vld [vmem:[%s6 + $0x8] sm:$0xff]
    %v253 = vld [vmem:[%s6 + $0x10] sm:$0xff]
    %v254 = vld [vmem:[%s6 + $0x18] sm:$0xff]
    %v255 = vld [vmem:[%s6 + $0x20] sm:$0xff]
    %v256 = vld [vmem:[%s6 + $0x28] sm:$0xff]
    %v257 = vld [vmem:[%s6 + $0x30] sm:$0xff]
    %v258 = vld [vmem:[%s6 + $0x38] sm:$0xff]
    %v259 = vld [vmem:[%s6 + $0x40] sm:$0xff]
    %v260 = vld [vmem:[%s6 + $0x48] sm:$0xff]
    %v261 = vld [vmem:[%s6 + $0x50] sm:$0xff]
    %v262 = vld [vmem:[%s6 + $0x58] sm:$0xff]
    %v263 = vld [vmem:[%s6 + $0x60] sm:$0xff]
    %v264 = vld [vmem:[%s6 + $0x68] sm:$0xff]
    %v265 = vld [vmem:[%s6 + $0x70] sm:$0xff]
    %v266 = vld [vmem:[%s6 + $0x78] sm:$0xff]
    %v267 = vld [vmem:[%s7] sm:$0x1]
    %v269 = vlaneseq
    %v270 = vshrl.u32 %v269, 7
    %v271 = vsub.s32 0, %v270
    %v272 = vrot.slane %v267, %v271
    %274 = vmatprep.subr.mxu0 0.0
    %275 = vmatpush1.msra.mxu0 %v251
    %276 = vmatprep.subr.mxu0 0.0
    %277 = vmatpush1.msra.mxu0 %v252
    %278 = vmatprep.subr.mxu0 0.0
    %279 = vmatpush1.msra.mxu0 %v253
    %280 = vmatprep.subr.mxu0 0.0
    %281 = vmatpush1.msra.mxu0 %v254
    %282 = vmatprep.subr.mxu0 0.0
    %283 = vmatpush1.msra.mxu0 %v255
    %284 = vmatprep.subr.mxu0 0.0
    %285 = vmatpush1.msra.mxu0 %v256
    %286 = vmatprep.subr.mxu0 0.0
    %287 = vmatpush1.msra.mxu0 %v257
    %288 = vmatprep.subr.mxu0 0.0
    %289 = vmatpush1.msra.mxu0 %v258
    %290 = vmatprep.subr.mxu0 0.0
    %291 = vmatpush1.msra.mxu0 %v259
    %292 = vmatprep.subr.mxu0 0.0
    %293 = vmatpush1.msra.mxu0 %v260
    %294 = vmatprep.subr.mxu0 0.0
    %295 = vmatpush1.msra.mxu0 %v261
    %296 = vmatprep.subr.mxu0 0.0
    %297 = vmatpush1.msra.mxu0 %v262
    %298 = vmatprep.subr.mxu0 0.0
    %299 = vmatpush1.msra.mxu0 %v263
    %300 = vmatprep.subr.mxu0 0.0
    %301 = vmatpush1.msra.mxu0 %v264
    %302 = vmatprep.subr.mxu0 0.0
    %303 = vmatpush1.msra.mxu0 %v265
    %304 = vmatprep.subr.mxu0 0.0
    %305 = vmatpush1.msra.mxu0 %v266
    %306 = vmatprep.subr.mxu0 0.0
    %307 = vmatpush1.msra.mxu0 0.0
    %308 = vmatprep.subr.mxu0 0.0
    %309 = vmatpush1.msra.mxu0 0.0
    %310 = vmatprep.subr.mxu0 0.0
    %311 = vmatpush1.msra.mxu0 0.0
    %312 = vmatprep.subr.mxu0 0.0
    %313 = vmatpush1.msra.mxu0 0.0
    %314 = vmatprep.subr.mxu0 0.0
    %315 = vmatpush1.msra.mxu0 0.0
    %316 = vmatprep.subr.mxu0 0.0
    %317 = vmatpush1.msra.mxu0 0.0
    %318 = vmatprep.subr.mxu0 0.0
    %319 = vmatpush1.msra.mxu0 0.0
    %320 = vmatprep.subr.mxu0 0.0
    %321 = vmatpush1.msra.mxu0 0.0
    %322 = vmatprep.subr.mxu0 0.0
    %323 = vmatpush1.msra.mxu0 0.0
    %324 = vmatprep.subr.mxu0 0.0
    %325 = vmatpush1.msra.mxu0 0.0
    %326 = vmatprep.subr.mxu0 0.0
    %327 = vmatpush1.msra.mxu0 0.0
    %328 = vmatprep.subr.mxu0 0.0
    %329 = vmatpush1.msra.mxu0 0.0
    %330 = vmatprep.subr.mxu0 0.0
    %331 = vmatpush1.msra.mxu0 0.0
    %332 = vmatprep.subr.mxu0 0.0
    %333 = vmatpush1.msra.mxu0 0.0
    %334 = vmatprep.subr.mxu0 0.0
    %335 = vmatpush1.msra.mxu0 0.0
    %336 = vmatprep.subr.mxu0 0.0
    %337 = vmatpush1.msra.mxu0 0.0
    %338 = vmatprep.mubr.f32.mxu0 0.0
    %339 = vmatmul.mubr.f32.gmra.mrb[0].mxu0 %v250
    %v340 = vpop.f32.mrb[0].mxu0
    %v341 = vadd.f32 %v272, %v340
    %v342 = vpop.f32.mrb[0].mxu0
    %343 = vdwg.mxu0
    %v344 = vtanh.pop %v341
    %s345 = sld [smem:[#allocation2]]
    %v346 = vstv %s345
    %v347 = vmul.f32 %v344, %v346
    %vm348 = vcmask 48128
    %349 = vst.msk [vmem:[#allocation6] sm:$0xff] %vm348, %v347
    // Predicated region
    $region38: #{actor_td3_forward.1} parent=1 // pred_check
      _
    $region39: #{actor_td3_forward.1} parent=1 // pred_check_branch
      %351 = sbr.rel (0) target = $region41
    $region40: #{actor_td3_forward.1} parent=1 // pred_region
      %s353 = ssub.s32 128, 128
      %354 = vsyncadd [#allocation5], %s353
      %s356 = sshll.u32 [#allocation6], 4
      %s357 = int_to_ptr.vmem [resolvable:$true] %s356
      %359 = dma.vmem_to_hbm [thread:$0]  %s357, 128, %s8, [#allocation5]
    $region41: #{actor_td3_forward.1} parent=1 // pred_fallthru
      _
    // Predicated region
    $region42: #{actor_td3_forward.1} parent=1 // pred_check
      _
    $region43: #{actor_td3_forward.1} parent=1 // pred_check_branch
      %361 = sbr.rel (0) target = $region45
    $region44: #{actor_td3_forward.1} parent=1 // pred_region
      %362 = dma.done [#allocation5], 128
    $region45: #{actor_td3_forward.1} parent=1 // pred_fallthru
      _
    %363 = vsyncpa [#allocation4], 1
    %364 = vsyncpa [#allocation5], 1

</llo_original>
